<compile_context>
chip_gen: v7x
topology: tpu7x:2x2x1
jax: 0.10.0
libtpu: 0.0.40
codegen_flags: <defaults>
</compile_context>

<pallas_src>
import functools

import jax
import jax.numpy as jnp
from jax import lax
from jax.experimental import pallas as pl
from jax.experimental.pallas import tpu as pltpu


# ----------------------------------------------------------------------------
# Per-generation VMEM limit (v5e/v6e: 128 MiB physical -> ~96 MiB scoped;
# v7x: 64 MiB -> ~48 MiB).  Conservative fallback if the query is unavailable.
# ----------------------------------------------------------------------------
def _query_vmem_capacity():
    default = 64 << 20
    try:
        fn = getattr(pltpu, "get_tpu_info", None)
        if fn is None:
            return default
        cap = int(getattr(fn(), "vmem_capacity_bytes", 0))
        return cap if cap > 0 else default
    except Exception:
        return default


_VMEM_CAP = _query_vmem_capacity()
_VMEM_LIMIT = max(32 << 20, (_VMEM_CAP * 3) // 4)


def _cdiv(a, b):
    return -(-a // b)


def _round_up(a, b):
    return _cdiv(a, b) * b


# ----------------------------------------------------------------------------
# Fused single-block kernel (small/medium N): the whole forward resident in VMEM.
# ----------------------------------------------------------------------------
def _make_fused_kernel(n_medium: int, pad: int, cdt, adj_x_first: bool):
    def kernel(*refs):
        # inputs : adj, x, w_enc, b_enc, (w_m, b_m)*n_medium, w_ml, b_ml, noise
        # outputs: score [N,N], ml [N, 2*pad]  (ml = [mean_pad | logv_pad])
        adj_ref, x_ref, w_e_ref, b_e_ref = refs[:4]
        rest = refs[4:]
        medium_refs = rest[: 2 * n_medium]
        w_ml_ref, b_ml_ref, noise_ref, score_ref, ml_ref = rest[2 * n_medium:]

        def mm(a, b):
            return jnp.dot(a.astype(cdt), b.astype(cdt),
                           preferred_element_type=jnp.float32)

        adj = adj_ref[...]

        # encode layer: reorder to (adj @ x) @ W when the feature dim has fewer
        # padded 128-lane tiles than the hidden dim (smaller MXU RHS width for
        # the N^2-dominant adj matmul).
        if adj_x_first:
            support = mm(mm(adj, x_ref[...]), w_e_ref[...]) + b_e_ref[...]
        else:
            support = mm(adj, mm(x_ref[...], w_e_ref[...])) + b_e_ref[...]

        # TODO(synk): for n_medium > ~2 stack medium weights into [L,H,H] refs
        # and iterate with lax.fori_loop to bound live ranges.
        for i in range(n_medium):
            w_ref = medium_refs[2 * i]
            b_ref = medium_refs[2 * i + 1]
            support = mm(adj, mm(support, w_ref[...])) + b_ref[...]

        # fused mean/logv heads; each head padded to its own 128-lane tile so
        # the split below is lane-tile aligned and the ml store is lane-dense.
        ml = mm(adj, mm(support, w_ml_ref[...])) + b_ml_ref[...]
        mean = ml[:, :pad]
        logv = ml[:, pad:]

        # reparameterization in f32: std = exp(logv), noise ~ U[0,1) with zeros
        # in the padded lanes (so padded z lanes are exactly 0).
        z = noise_ref[...] * jnp.exp(logv) + mean

        # inner-product decoder z @ z.T via a dim-1/dim-1 contraction (no
        # explicit transpose materialized; if pl.lower_as_mlir ever shows a
        # relayout here, pre-transpose z once instead).
        zc = z.astype(cdt)
        score_ref[...] = lax.dot_general(
            zc, zc,
            dimension_numbers=(((1,), (1,)), ((), ())),
            preferred_element_type=jnp.float32,
        ).astype(score_ref.dtype)
        ml_ref[...] = ml.astype(ml_ref.dtype)

    return kernel


def _forward_fused(adj, x, w_e, b_e, medium, w_ml, b_ml, noise_p, *, pad, cdt):
    n = adj.shape[0]
    in_feat = x.shape[1]
    hidden = w_e.shape[1]
    n_medium = len(medium)

    adj_x_first = _cdiv(in_feat, 128) < _cdiv(hidden, 128)

    inputs = [adj.astype(cdt), x.astype(cdt), w_e.astype(cdt), b_e]
    for w_m, b_m in medium:
        inputs += [w_m.astype(cdt), b_m]
    inputs += [w_ml.astype(cdt), b_ml, noise_p]

    kernel = _make_fused_kernel(n_medium, pad, cdt, adj_x_first)

    itemsize = jnp.dtype(cdt).itemsize
    dims = [(in_feat, hidden)] + [(hidden, hidden)] * n_medium + [(hidden, 2 * pad)]
    flops = sum(2 * n * fi * fo + 2 * n * n * fo for fi, fo in dims) + 2 * n * n * pad
    weight_bytes = sum(fi * fo for fi, fo in dims) * itemsize
    cost = pl.CostEstimate(
        flops=flops,
        transcendentals=n * pad,
        bytes_accessed=(n * n * (itemsize + 4)
                        + n * (in_feat * itemsize + 3 * pad * 4)
                        + weight_bytes),
    )

    def full_block(a):
        return pl.BlockSpec(a.shape, lambda: (0, 0))

    score, ml = pl.pallas_call(
        kernel,
        out_shape=(
            jax.ShapeDtypeStruct((n, n), jnp.float32),
            jax.ShapeDtypeStruct((n, 2 * pad), jnp.float32),
        ),
        in_specs=[full_block(a) for a in inputs],
        out_specs=(
            pl.BlockSpec((n, n), lambda: (0, 0)),
            pl.BlockSpec((n, 2 * pad), lambda: (0, 0)),
        ),
        compiler_params=pltpu.CompilerParams(vmem_limit_bytes=_VMEM_LIMIT),
        cost_estimate=cost,
    )(*inputs)
    return score, ml


# ----------------------------------------------------------------------------
# Tiled large-N path: one tiled pallas_call per GCN layer, a fused head+reparam
# call, and a tiled inner-product decoder.
# ----------------------------------------------------------------------------
def _make_gcn_tiled_kernel(cdt):
    def kernel(adj_ref, h_ref, w_ref, b_ref, out_ref, acc_ref):
        @pl.when(pl.program_id(1) == 0)
        def _():
            acc_ref[...] = jnp.zeros_like(acc_ref)

        hw = jnp.dot(h_ref[...].astype(cdt), w_ref[...].astype(cdt),
                     preferred_element_type=jnp.float32)
        acc_ref[...] += jnp.dot(adj_ref[...].astype(cdt), hw.astype(cdt),
                                preferred_element_type=jnp.float32)

        @pl.when(pl.program_id(1) == pl.num_programs(1) - 1)
        def _():
            out_ref[...] = (acc_ref[...] + b_ref[...]).astype(out_ref.dtype)

    return kernel


def _gcn_layer_tiled(adj, h, w, b, *, tm, tk, cdt, out_dtype):
    n = adj.shape[0]
    f = h.shape[1]
    o = w.shape[1]
    return pl.pallas_call(
        _make_gcn_tiled_kernel(cdt),
        out_shape=jax.ShapeDtypeStruct((n, o), out_dtype),
        grid=(n // tm, n // tk),
        in_specs=[
            pl.BlockSpec((tm, tk), lambda i, k: (i, k)),
            pl.BlockSpec((tk, f), lambda i, k: (k, 0)),
            pl.BlockSpec((f, o), lambda i, k: (0, 0)),
            pl.BlockSpec((1, o), lambda i, k: (0, 0)),
        ],
        out_specs=pl.BlockSpec((tm, o), lambda i, k: (i, 0)),
        scratch_shapes=[pltpu.VMEM((tm, o), jnp.float32)],
        compiler_params=pltpu.CompilerParams(
            dimension_semantics=("parallel", "arbitrary"),
            vmem_limit_bytes=_VMEM_LIMIT,
        ),
    )(adj, h, w, b)


def _make_head_tiled_kernel(cdt, pad):
    def kernel(adj_ref, h_ref, w_ref, b_ref, noise_ref, ml_ref, z_ref, acc_ref):
        k = pl.program_id(1)

        @pl.when(k == 0)
        def _():
            acc_ref[...] = jnp.zeros_like(acc_ref)

        hw = jnp.dot(h_ref[...].astype(cdt), w_ref[...].astype(cdt),
                     preferred_element_type=jnp.float32)
        acc_ref[...] += jnp.dot(adj_ref[...].astype(cdt), hw.astype(cdt),
                                preferred_element_type=jnp.float32)

        @pl.when(k == pl.num_programs(1) - 1)
        def _():
            ml = acc_ref[...] + b_ref[...]
            ml_ref[...] = ml.astype(ml_ref.dtype)
            mean = ml[:, :pad]            # lane-tile-aligned split
            logv = ml[:, pad:]
            z_ref[...] = (noise_ref[...] * jnp.exp(logv) + mean).astype(z_ref.dtype)

    return kernel


def _head_tiled(adj, h, w_ml, b_ml, noise_p, *, tm, tk, cdt, pad):
    n = adj.shape[0]
    f = h.shape[1]
    o = w_ml.shape[1]  # 2 * pad
    return pl.pallas_call(
        _make_head_tiled_kernel(cdt, pad),
        out_shape=(
            jax.ShapeDtypeStruct((n, o), jnp.float32),
            jax.ShapeDtypeStruct((n, pad), cdt),
        ),
        grid=(n // tm, n // tk),
        in_specs=[
            pl.BlockSpec((tm, tk), lambda i, k: (i, k)),
            pl.BlockSpec((tk, f), lambda i, k: (k, 0)),
            pl.BlockSpec((f, o), lambda i, k: (0, 0)),
            pl.BlockSpec((1, o), lambda i, k: (0, 0)),
            pl.BlockSpec((tm, pad), lambda i, k: (i, 0)),
        ],
        out_specs=(
            pl.BlockSpec((tm, o), lambda i, k: (i, 0)),
            pl.BlockSpec((tm, pad), lambda i, k: (i, 0)),
        ),
        scratch_shapes=[pltpu.VMEM((tm, o), jnp.float32)],
        compiler_params=pltpu.CompilerParams(
            dimension_semantics=("parallel", "arbitrary"),
            vmem_limit_bytes=_VMEM_LIMIT,
        ),
    )(adj, h, w_ml, b_ml, noise_p)


def _make_decoder_kernel(cdt):
    def kernel(zl_ref, zr_ref, out_ref):
        # TODO(synk): exploit score symmetry (compute only j >= i tiles and
        # mirror the result) to halve decoder flops and HBM store traffic.
        out_ref[...] = lax.dot_general(
            zl_ref[...].astype(cdt), zr_ref[...].astype(cdt),
            dimension_numbers=(((1,), (1,)), ((), ())),
            preferred_element_type=jnp.float32,
        ).astype(out_ref.dtype)

    return kernel


def _decoder_tiled(z, *, tm, cdt):
    n, pad = z.shape
    return pl.pallas_call(
        _make_decoder_kernel(cdt),
        out_shape=jax.ShapeDtypeStruct((n, n), jnp.float32),
        grid=(n // tm, n // tm),
        in_specs=[
            pl.BlockSpec((tm, pad), lambda i, j: (i, 0)),
            pl.BlockSpec((tm, pad), lambda i, j: (j, 0)),
        ],
        out_specs=pl.BlockSpec((tm, tm), lambda i, j: (i, j)),
        compiler_params=pltpu.CompilerParams(
            dimension_semantics=("parallel", "parallel"),
            vmem_limit_bytes=_VMEM_LIMIT,
        ),
    )(z, z)


def _forward_tiled(adj, x, w_e, b_e, medium, w_ml, b_ml, noise_p, *, pad, cdt):
    n = adj.shape[0]

    def pick(cands):
        for c in cands:
            if n % c == 0:
                return c
        return 128

    tm = pick((256, 128))
    # Smaller K tiles on small-VMEM generations (v7x: 64 MiB) keep the
    # double-buffered adj tiles comfortably resident.
    tk = pick((256, 128) if _VMEM_CAP <= (64 << 20) else (512, 256, 128))

    adj_c = adj.astype(cdt)
    h = _gcn_layer_tiled(adj_c, x.astype(cdt), w_e.astype(cdt), b_e,
                         tm=tm, tk=tk, cdt=cdt, out_dtype=cdt)
    for w_m, b_m in medium:
        h = _gcn_layer_tiled(adj_c, h, w_m.astype(cdt), b_m,
                             tm=tm, tk=tk, cdt=cdt, out_dtype=cdt)
    ml, z = _head_tiled(adj_c, h, w_ml.astype(cdt), b_ml, noise_p,
                        tm=tm, tk=tk, cdt=cdt, pad=pad)
    score = _decoder_tiled(z, tm=tm, cdt=cdt)
    return score, ml


# ----------------------------------------------------------------------------
# Public forward
# ----------------------------------------------------------------------------
@functools.partial(jax.jit, static_argnames=("use_bf16", "force_tiled"))
def vgae_forward(params, adj, x, noise, use_bf16=False, force_tiled=False):
    n = adj.shape[0]
    w_e, b_e = params["encode"]
    medium = params["medium"]
    w_mu, b_mu = params["mean"]
    w_lv, b_lv = params["logv"]
    emb = w_mu.shape[1]
    in_feat = w_e.shape[0]
    hidden = w_e.shape[1]
    pad = _round_up(emb, 128)
    cdt = jnp.bfloat16 if use_bf16 else jnp.float32

    # Head fusion with per-head 128-lane padding: mean occupies lanes [0, pad),
    # logv lanes [pad, 2*pad).  Zero weight/bias padding keeps padded logv lanes
    # at exactly 0 (exp -> 1) and zero-padded noise keeps padded z lanes at
    # exactly 0, so score is unaffected.
    def pad_cols(a):
        return jnp.pad(a, ((0, 0), (0, pad - a.shape[1])))

    w_ml = jnp.concatenate([pad_cols(w_mu), pad_cols(w_lv)], axis=1)
    b_ml = jnp.concatenate([pad_cols(b_mu), pad_cols(b_lv)], axis=1)
    noise_p = pad_cols(noise.astype(jnp.float32))

    adj = adj.astype(jnp.float32)
    x = x.astype(jnp.float32)

    itemsize = jnp.dtype(cdt).itemsize
    fused_bytes = (
        n * n * (itemsize + 4)                                   # adj + score
        + 4 * n * (in_feat + 4 * hidden + 6 * pad)               # activations
        + 4 * (in_feat * hidden + len(medium) * hidden * hidden
               + hidden * 2 * pad)                               # weights
    )
    want_tiled = force_tiled or fused_bytes > (_VMEM_LIMIT // 2)

    if want_tiled and n % 128 == 0:
        score, ml = _forward_tiled(adj, x, w_e, b_e, medium, w_ml, b_ml, noise_p,
                                   pad=pad, cdt=cdt)
    else:
        # TODO(synk): zero-pad N up to a multiple of 128 so the tiled path also
        # covers ragged graph sizes; falling back to the fused path here.
        score, ml = _forward_fused(adj, x, w_e, b_e, medium, w_ml, b_ml, noise_p,
                                   pad=pad, cdt=cdt)

    mean = ml[:, :emb]
    logv = ml[:, pad:pad + emb]
    return score, mean, logv


# ----------------------------------------------------------------------------
# Parameter init matching GraphConvolution.reset_parameters:
#   stdv = 1/sqrt(out_features); W, b ~ U(-stdv, stdv)
# ----------------------------------------------------------------------------
def init_gcn_params(key, in_features, out_features):
    stdv = 1.0 / (out_features ** 0.5)
    kw, kb = jax.random.split(key)
    w = jax.random.uniform(kw, (in_features, out_features), jnp.float32, -stdv, stdv)
    b = jax.random.uniform(kb, (1, out_features), jnp.float32, -stdv, stdv)
    return w, b


def init_vgae_params(key, input_size, emb_size, hidden_size, layers=2):
    keys = jax.random.split(key, layers + 2)
    return {
        "encode": init_gcn_params(keys[0], input_size, hidden_size),
        "medium": [
            init_gcn_params(keys[1 + i], hidden_size, hidden_size)
            for i in range(layers - 2)
        ],
        "mean": init_gcn_params(keys[layers - 1], hidden_size, emb_size),
        "logv": init_gcn_params(keys[layers], hidden_size, emb_size),
    }


if __name__ == "__main__":
    HP = jax.lax.Precision.HIGHEST

    def reference(params, adj, x, noise):
        dot = lambda a, b: jnp.dot(a, b, precision=HP)
        w_e, b_e = params["encode"]
        support = dot(adj, dot(x, w_e)) + b_e
        for w_m, b_m in params["medium"]:
            support = dot(adj, dot(support, w_m)) + b_m
        w_mu, b_mu = params["mean"]
        w_lv, b_lv = params["logv"]
        mean = dot(adj, dot(support, w_mu)) + b_mu
        logv = dot(adj, dot(support, w_lv)) + b_lv
        z = noise * jnp.exp(logv) + mean
        return dot(z, z.T), mean, logv

    def close(a, b, tol):
        atol = tol * (float(jnp.max(jnp.abs(b))) + 1.0)
        return bool(jnp.allclose(a, b, rtol=tol, atol=atol))

    def make_inputs(key, n, in_feat, emb, hidden, layers, normalize=False):
        k_params, k_adj, k_x, k_noise = jax.random.split(key, 4)
        params = init_vgae_params(k_params, in_feat, emb, hidden, layers)
        adj_raw = jax.random.uniform(k_adj, (n, n), jnp.float32)
        adj = ((adj_raw + adj_raw.T) * 0.5 > 0.5).astype(jnp.float32)
        if normalize:
            deg = jnp.maximum(adj.sum(axis=1, keepdims=True), 1.0)
            adj = adj / deg
        x = jax.random.uniform(k_x, (n, in_feat), jnp.float32)
        noise = jax.random.uniform(k_noise, (n, emb), jnp.float32)   # torch.rand
        return params, adj, x, noise

    N, IN_F, HID, EMB = 16, 8, 32, 16
    ok = True

    # Fused single-block path, exact f32 module semantics (layers=2 default,
    # layers=3 exercises the medium-layer loop).
    for layers in (2, 3):
        params, adj, x, noise = make_inputs(jax.random.PRNGKey(0), N, IN_F, EMB, HID, layers)
        score, mean, logv = vgae_forward(params, adj, x, noise)
        jax.block_until_ready(score)
        sr, mr, lr = reference(params, adj, x, noise)
        ok &= close(score, sr, 1e-4) and close(mean, mr, 1e-4) and close(logv, lr, 1e-4)

    # Fused path with bf16 MXU operands (documented approximate numerics).
    params, adj, x, noise = make_inputs(jax.random.PRNGKey(0), N, IN_F, EMB, HID, 2)
    score, mean, logv = vgae_forward(params, adj, x, noise, use_bf16=True)
    jax.block_until_ready(score)
    sr, mr, lr = reference(params, adj, x, noise)
    ok &= close(score, sr, 1e-1) and close(mean, mr, 1e-1) and close(logv, lr, 1e-1)

    # Tiled large-N path (row-normalized adjacency keeps magnitudes bounded).
    params, adj, x, noise = make_inputs(jax.random.PRNGKey(1), 768, IN_F, EMB, HID, 3,
                                        normalize=True)
    score, mean, logv = vgae_forward(params, adj, x, noise, force_tiled=True)
    jax.block_until_ready(score)
    sr, mr, lr = reference(params, adj, x, noise)
    ok &= close(score, sr, 1e-3) and close(mean, mr, 1e-3) and close(logv, lr, 1e-3)

    assert ok, "Pallas VGAE forward does not match the pure-JAX reference"
    print("KERNEL_OK")
</pallas_src>

<mosaic_0001>
module attributes {stable_mosaic.version = 11 : i64} {
  func.func @kernel(%arg0: memref<16x16xf32, #tpu.memory_space<vmem>>, %arg1: memref<16x8xf32, #tpu.memory_space<vmem>>, %arg2: memref<8x32xf32, #tpu.memory_space<vmem>>, %arg3: memref<1x32xf32, #tpu.memory_space<vmem>>, %arg4: memref<32x256xf32, #tpu.memory_space<vmem>>, %arg5: memref<1x256xf32, #tpu.memory_space<vmem>>, %arg6: memref<16x128xf32, #tpu.memory_space<vmem>>, %arg7: memref<16x16xf32, #tpu.memory_space<vmem>>, %arg8: memref<16x256xf32, #tpu.memory_space<vmem>>) attributes {dimension_semantics = [], scalar_prefetch = 0 : i64, scratch_operands = 0 : i64, tpu.core_type = #tpu.core_type<tc>} {
    %c0 = arith.constant 0 : index
    %c0_0 = arith.constant 0 : index
    %0 = vector.load %arg0[%c0, %c0_0] : memref<16x16xf32, #tpu.memory_space<vmem>>, vector<16x16xf32>
    %c0_1 = arith.constant 0 : index
    %c0_2 = arith.constant 0 : index
    %1 = vector.load %arg1[%c0_1, %c0_2] : memref<16x8xf32, #tpu.memory_space<vmem>>, vector<16x8xf32>
    %c0_3 = arith.constant 0 : index
    %c0_4 = arith.constant 0 : index
    %2 = vector.load %arg2[%c0_3, %c0_4] : memref<8x32xf32, #tpu.memory_space<vmem>>, vector<8x32xf32>
    %cst = arith.constant dense<0.000000e+00> : vector<16x32xf32>
    %3 = tpu.matmul %1, %2, %cst {dimension_numbers = #tpu.dot_dimension_numbers<[1], [0], [0], [1], [0, 0, 1, 1], [], []>} : vector<16x8xf32>, vector<8x32xf32>, vector<16x32xf32> -> vector<16x32xf32>
    %cst_5 = arith.constant dense<0.000000e+00> : vector<16x32xf32>
    %4 = tpu.matmul %0, %3, %cst_5 {dimension_numbers = #tpu.dot_dimension_numbers<[1], [0], [0], [1], [0, 0, 1, 1], [], []>} : vector<16x16xf32>, vector<16x32xf32>, vector<16x32xf32> -> vector<16x32xf32>
    %c0_6 = arith.constant 0 : index
    %c0_7 = arith.constant 0 : index
    %5 = vector.load %arg3[%c0_6, %c0_7] : memref<1x32xf32, #tpu.memory_space<vmem>>, vector<1x32xf32>
    %6 = vector.broadcast %5 : vector<1x32xf32> to vector<16x32xf32>
    %7 = arith.addf %4, %6 : vector<16x32xf32>
    %c0_8 = arith.constant 0 : index
    %c0_9 = arith.constant 0 : index
    %8 = vector.load %arg4[%c0_8, %c0_9] : memref<32x256xf32, #tpu.memory_space<vmem>>, vector<32x256xf32>
    %cst_10 = arith.constant dense<0.000000e+00> : vector<16x256xf32>
    %9 = tpu.matmul %7, %8, %cst_10 {dimension_numbers = #tpu.dot_dimension_numbers<[1], [0], [0], [1], [0, 0, 1, 1], [], []>} : vector<16x32xf32>, vector<32x256xf32>, vector<16x256xf32> -> vector<16x256xf32>
    %cst_11 = arith.constant dense<0.000000e+00> : vector<16x256xf32>
    %10 = tpu.matmul %0, %9, %cst_11 {dimension_numbers = #tpu.dot_dimension_numbers<[1], [0], [0], [1], [0, 0, 1, 1], [], []>} : vector<16x16xf32>, vector<16x256xf32>, vector<16x256xf32> -> vector<16x256xf32>
    %c0_12 = arith.constant 0 : index
    %c0_13 = arith.constant 0 : index
    %11 = vector.load %arg5[%c0_12, %c0_13] : memref<1x256xf32, #tpu.memory_space<vmem>>, vector<1x256xf32>
    %12 = vector.broadcast %11 : vector<1x256xf32> to vector<16x256xf32>
    %13 = arith.addf %10, %12 : vector<16x256xf32>
    %14 = vector.extract_strided_slice %13 {offsets = [0, 0], sizes = [16, 128], strides = [1, 1]} : vector<16x256xf32> to vector<16x128xf32>
    %15 = vector.extract_strided_slice %13 {offsets = [0, 128], sizes = [16, 128], strides = [1, 1]} : vector<16x256xf32> to vector<16x128xf32>
    %c0_14 = arith.constant 0 : index
    %c0_15 = arith.constant 0 : index
    %16 = vector.load %arg6[%c0_14, %c0_15] : memref<16x128xf32, #tpu.memory_space<vmem>>, vector<16x128xf32>
    %17 = math.exp %15 : vector<16x128xf32>
    %18 = arith.mulf %16, %17 : vector<16x128xf32>
    %19 = arith.addf %18, %14 : vector<16x128xf32>
    %cst_16 = arith.constant dense<0.000000e+00> : vector<16x16xf32>
    %20 = tpu.matmul %19, %19, %cst_16 {dimension_numbers = #tpu.dot_dimension_numbers<[1], [1], [0], [0], [0, 0, 1, 0], [], []>} : vector<16x128xf32>, vector<16x128xf32>, vector<16x16xf32> -> vector<16x16xf32>
    %c0_17 = arith.constant 0 : index
    %c0_18 = arith.constant 0 : index
    %21 = vector.load %arg7[%c0_17, %c0_18] : memref<16x16xf32, #tpu.memory_space<vmem>>, vector<16x16xf32>
    tpu.vector_store %arg7[%c0_17, %c0_18], %20 {strides = array<i32>} : memref<16x16xf32, #tpu.memory_space<vmem>>, vector<16x16xf32>,
    %c0_19 = arith.constant 0 : index
    %c0_20 = arith.constant 0 : index
    %22 = vector.load %arg8[%c0_19, %c0_20] : memref<16x256xf32, #tpu.memory_space<vmem>>, vector<16x256xf32>
    tpu.vector_store %arg8[%c0_19, %c0_20], %13 {strides = array<i32>} : memref<16x256xf32, #tpu.memory_space<vmem>>, vector<16x256xf32>,
    return
  }
}

</mosaic_0001>

<llo_original>
// kernel: vgae_forward.1
$region0: #{vgae_forward.1}
  #allocation0 [shape = 'u32[]', space=smem, size = 0x4, offset = 0x4, fixed_abs, tag = 'smem constant byte address 0x4 - core index']
  #allocation1 [shape = 'u32[144,128]{1,0:T(1,128)}', space=vmem, size = 0x12000, scoped, tag = 'internal scratch']
  %s0 = inlined_call_operand.vmem [shape: f32[16,16], index: 0, kind: input, shape index: {}]
  %s1 = inlined_call_operand.vmem [shape: f32[16,8], index: 1, kind: input, shape index: {}]
  %s2 = inlined_call_operand.vmem [shape: f32[8,32], index: 2, kind: input, shape index: {}]
  %s3 = inlined_call_operand.vmem [shape: f32[1,32], index: 3, kind: input, shape index: {}]
  %s4 = inlined_call_operand.vmem [shape: f32[32,256], index: 4, kind: input, shape index: {}]
  %s5 = inlined_call_operand.vmem [shape: f32[1,256], index: 5, kind: input, shape index: {}]
  %s6 = inlined_call_operand.vmem [shape: f32[16,128], index: 6, kind: input, shape index: {}]
  %s7 = inlined_call_operand.hbm [shape: f32[16,16], index: 7, kind: output, shape index: {0}]
  %s8 = inlined_call_operand.vmem [shape: f32[16,256], index: 8, kind: output, shape index: {1}]
  %9 = xla_tuple %s7, %s8
  %s10 = sld [smem:[#allocation0]]
  $region46: #{vgae_forward.1} parent=0
    _
  %s12 = ssub.s32 1, %s10
  %s13 = scalar_select 0, %s12, %s10
  $region1: #{vgae_forward.1} parent=0
    #allocation2 [shape = 'u8[8192]{0}', space=vmem, size = 0x2000, scoped, tag = 'output window, operand 0, single buffered']
    #allocation3 [shape = 's32[1]{0}', space=sflag, size = 0x4, scoped, tag = 'scoped memory for vgae_forward.1']
    %14 = vsyncpa [#allocation3], 0
    // Predicated region
    $region2: #{vgae_forward.1} parent=1 // pred_check
      _
    $region3: #{vgae_forward.1} parent=1 // pred_check_branch
      %16 = sbr.rel (0) target = $region5
    $region4: #{vgae_forward.1} parent=1 // pred_region
      _
    $region5: #{vgae_forward.1} parent=1 // pred_fallthru
      _
    // Predicated region
    $region6: #{vgae_forward.1} parent=1 // pred_check
      _
    $region7: #{vgae_forward.1} parent=1 // pred_check_branch
      %18 = sbr.rel (0) target = $region9
    $region8: #{vgae_forward.1} parent=1 // pred_region
      _
    $region9: #{vgae_forward.1} parent=1 // pred_fallthru
      _
    // Predicated region
    $region10: #{vgae_forward.1} parent=1 // pred_check
      _
    $region11: #{vgae_forward.1} parent=1 // pred_check_branch
      %20 = sbr.rel (0) target = $region13
    $region12: #{vgae_forward.1} parent=1 // pred_region
      _
    $region13: #{vgae_forward.1} parent=1 // pred_fallthru
      _
    // Predicated region
    $region14: #{vgae_forward.1} parent=1 // pred_check
      _
    $region15: #{vgae_forward.1} parent=1 // pred_check_branch
      %22 = sbr.rel (0) target = $region17
    $region16: #{vgae_forward.1} parent=1 // pred_region
      _
    $region17: #{vgae_forward.1} parent=1 // pred_fallthru
      _
    // Predicated region
    $region18: #{vgae_forward.1} parent=1 // pred_check
      _
    $region19: #{vgae_forward.1} parent=1 // pred_check_branch
      %24 = sbr.rel (0) target = $region21
    $region20: #{vgae_forward.1} parent=1 // pred_region
      _
    $region21: #{vgae_forward.1} parent=1 // pred_fallthru
      _
    // Predicated region
    $region22: #{vgae_forward.1} parent=1 // pred_check
      _
    $region23: #{vgae_forward.1} parent=1 // pred_check_branch
      %26 = sbr.rel (0) target = $region25
    $region24: #{vgae_forward.1} parent=1 // pred_region
      _
    $region25: #{vgae_forward.1} parent=1 // pred_fallthru
      _
    // Predicated region
    $region26: #{vgae_forward.1} parent=1 // pred_check
      _
    $region27: #{vgae_forward.1} parent=1 // pred_check_branch
      %28 = sbr.rel (0) target = $region29
    $region28: #{vgae_forward.1} parent=1 // pred_region
      _
    $region29: #{vgae_forward.1} parent=1 // pred_fallthru
      _
    %v29 = vld [vmem:[%s0] sm:$0xff]
    %v30 = vld [vmem:[%s0 + $0x8] sm:$0xff]
    %v31 = vld [vmem:[%s1] sm:$0xff]
    %v32 = vld [vmem:[%s1 + $0x8] sm:$0xff]
    %v33 = vld [vmem:[%s2] sm:$0xff]
    %vm34 = vcmask 64512
    %v36 = vsel %vm34, %v31, 0
    %v39 = vsel %vm34, %v32, 0
    %41 = vmatprep.subr.mxu0 0.0
    %42 = vmatpush1.msra.mxu0 %v33
    %43 = vmatprep.subr.mxu0 0.0
    %44 = vmatpush1.msra.mxu0 0.0
    %45 = vmatprep.subr.mxu0 0.0
    %46 = vmatpush1.msra.mxu0 0.0
    %47 = vmatprep.subr.mxu0 0.0
    %48 = vmatpush1.msra.mxu0 0.0
    %49 = vmatprep.subr.mxu0 0.0
    %50 = vmatpush1.msra.mxu0 0.0
    %51 = vmatprep.subr.mxu0 0.0
    %52 = vmatpush1.msra.mxu0 0.0
    %53 = vmatprep.subr.mxu0 0.0
    %54 = vmatpush1.msra.mxu0 0.0
    %55 = vmatprep.subr.mxu0 0.0
    %56 = vmatpush1.msra.mxu0 0.0
    %57 = vmatprep.subr.mxu0 0.0
    %58 = vmatpush1.msra.mxu0 0.0
    %59 = vmatprep.subr.mxu0 0.0
    %60 = vmatpush1.msra.mxu0 0.0
    %61 = vmatprep.subr.mxu0 0.0
    %62 = vmatpush1.msra.mxu0 0.0
    %63 = vmatprep.subr.mxu0 0.0
    %64 = vmatpush1.msra.mxu0 0.0
    %65 = vmatprep.subr.mxu0 0.0
    %66 = vmatpush1.msra.mxu0 0.0
    %67 = vmatprep.subr.mxu0 0.0
    %68 = vmatpush1.msra.mxu0 0.0
    %69 = vmatprep.subr.mxu0 0.0
    %70 = vmatpush1.msra.mxu0 0.0
    %71 = vmatprep.subr.mxu0 0.0
    %72 = vmatpush1.msra.mxu0 0.0
    %73 = vmatprep.subr.mxu0 0.0
    %74 = vmatpush1.msra.mxu0 0.0
    %75 = vmatprep.subr.mxu0 0.0
    %76 = vmatpush1.msra.mxu0 0.0
    %77 = vmatprep.subr.mxu0 0.0
    %78 = vmatpush1.msra.mxu0 0.0
    %79 = vmatprep.subr.mxu0 0.0
    %80 = vmatpush1.msra.mxu0 0.0
    %81 = vmatprep.subr.mxu0 0.0
    %82 = vmatpush1.msra.mxu0 0.0
    %83 = vmatprep.subr.mxu0 0.0
    %84 = vmatpush1.msra.mxu0 0.0
    %85 = vmatprep.subr.mxu0 0.0
    %86 = vmatpush1.msra.mxu0 0.0
    %87 = vmatprep.subr.mxu0 0.0
    %88 = vmatpush1.msra.mxu0 0.0
    %89 = vmatprep.subr.mxu0 0.0
    %90 = vmatpush1.msra.mxu0 0.0
    %91 = vmatprep.subr.mxu0 0.0
    %92 = vmatpush1.msra.mxu0 0.0
    %93 = vmatprep.subr.mxu0 0.0
    %94 = vmatpush1.msra.mxu0 0.0
    %95 = vmatprep.subr.mxu0 0.0
    %96 = vmatpush1.msra.mxu0 0.0
    %97 = vmatprep.subr.mxu0 0.0
    %98 = vmatpush1.msra.mxu0 0.0
    %99 = vmatprep.subr.mxu0 0.0
    %100 = vmatpush1.msra.mxu0 0.0
    %101 = vmatprep.subr.mxu0 0.0
    %102 = vmatpush1.msra.mxu0 0.0
    %103 = vmatprep.subr.mxu0 0.0
    %104 = vmatpush1.msra.mxu0 0.0
    %105 = vmatprep.mubr.f32.mxu0 0.0
    %106 = vmatmul.mubr.f32.gmra.mrb[0].mxu0 %v36
    %v107 = vpop.f32.mrb[0].mxu0
    %v108 = vadd.f32 0.0, %v107
    %v109 = vpop.f32.mrb[0].mxu0
    %110 = vmatprep.mubr.f32.mxu0 0.0
    %111 = vmatmul.mubr.f32.gmra.mrb[0].mxu0 %v39
    %v112 = vpop.f32.mrb[0].mxu0
    %v113 = vadd.f32 0.0, %v112
    %v114 = vpop.f32.mrb[0].mxu0
    %115 = vdwg.mxu0
    %v116 = vld [vmem:[%s3] sm:$0x1]
    %v118 = vlaneseq
    %v119 = vshrl.u32 %v118, 7
    %v120 = vsub.s32 0, %v119
    %v121 = vrot.slane %v116, %v120
    %vm123 = vcmask 130048
    %v125 = vsel %vm123, %v29, 0
    %v128 = vsel %vm123, %v30, 0
    %130 = vmatprep.subr.mxu0 0.0
    %131 = vmatpush1.msra.mxu0 %v108
    %132 = vmatprep.subr.mxu0 0.0
    %133 = vmatpush1.msra.mxu0 %v113
    %134 = vmatprep.subr.mxu0 0.0
    %135 = vmatpush1.msra.mxu0 0.0
    %136 = vmatprep.subr.mxu0 0.0
    %137 = vmatpush1.msra.mxu0 0.0
    %138 = vmatprep.subr.mxu0 0.0
    %139 = vmatpush1.msra.mxu0 0.0
    %140 = vmatprep.subr.mxu0 0.0
    %141 = vmatpush1.msra.mxu0 0.0
    %142 = vmatprep.subr.mxu0 0.0
    %143 = vmatpush1.msra.mxu0 0.0
    %144 = vmatprep.subr.mxu0 0.0
    %145 = vmatpush1.msra.mxu0 0.0
    %146 = vmatprep.subr.mxu0 0.0
    %147 = vmatpush1.msra.mxu0 0.0
    %148 = vmatprep.subr.mxu0 0.0
    %149 = vmatpush1.msra.mxu0 0.0
    %150 = vmatprep.subr.mxu0 0.0
    %151 = vmatpush1.msra.mxu0 0.0
    %152 = vmatprep.subr.mxu0 0.0
    %153 = vmatpush1.msra.mxu0 0.0
    %154 = vmatprep.subr.mxu0 0.0
    %155 = vmatpush1.msra.mxu0 0.0
    %156 = vmatprep.subr.mxu0 0.0
    %157 = vmatpush1.msra.mxu0 0.0
    %158 = vmatprep.subr.mxu0 0.0
    %159 = vmatpush1.msra.mxu0 0.0
    %160 = vmatprep.subr.mxu0 0.0
    %161 = vmatpush1.msra.mxu0 0.0
    %162 = vmatprep.subr.mxu0 0.0
    %163 = vmatpush1.msra.mxu0 0.0
    %164 = vmatprep.subr.mxu0 0.0
    %165 = vmatpush1.msra.mxu0 0.0
    %166 = vmatprep.subr.mxu0 0.0
    %167 = vmatpush1.msra.mxu0 0.0
    %168 = vmatprep.subr.mxu0 0.0
    %169 = vmatpush1.msra.mxu0 0.0
    %170 = vmatprep.subr.mxu0 0.0
    %171 = vmatpush1.msra.mxu0 0.0
    %172 = vmatprep.subr.mxu0 0.0
    %173 = vmatpush1.msra.mxu0 0.0
    %174 = vmatprep.subr.mxu0 0.0
    %175 = vmatpush1.msra.mxu0 0.0
    %176 = vmatprep.subr.mxu0 0.0
    %177 = vmatpush1.msra.mxu0 0.0
    %178 = vmatprep.subr.mxu0 0.0
    %179 = vmatpush1.msra.mxu0 0.0
    %180 = vmatprep.subr.mxu0 0.0
    %181 = vmatpush1.msra.mxu0 0.0
    %182 = vmatprep.subr.mxu0 0.0
    %183 = vmatpush1.msra.mxu0 0.0
    %184 = vmatprep.subr.mxu0 0.0
    %185 = vmatpush1.msra.mxu0 0.0
    %186 = vmatprep.subr.mxu0 0.0
    %187 = vmatpush1.msra.mxu0 0.0
    %188 = vmatprep.subr.mxu0 0.0
    %189 = vmatpush1.msra.mxu0 0.0
    %190 = vmatprep.subr.mxu0 0.0
    %191 = vmatpush1.msra.mxu0 0.0
    %192 = vmatprep.subr.mxu0 0.0
    %193 = vmatpush1.msra.mxu0 0.0
    %194 = vmatprep.mubr.f32.mxu0 0.0
    %195 = vmatmul.mubr.f32.gmra.mrb[0].mxu0 %v125
    %v196 = vpop.f32.mrb[0].mxu0
    %v197 = vadd.f32 %v121, %v196
    %v198 = vpop.f32.mrb[0].mxu0
    %199 = vmatprep.mubr.f32.mxu0 0.0
    %200 = vmatmul.mubr.f32.gmra.mrb[0].mxu0 %v128
    %v201 = vpop.f32.mrb[0].mxu0
    %v202 = vadd.f32 %v121, %v201
    %v203 = vpop.f32.mrb[0].mxu0
    %204 = vdwg.mxu0
    %v205 = vld [vmem:[%s4] sm:$0xff]
    %v206 = vld [vmem:[%s4 + $0x8] sm:$0xff]
    %v207 = vld [vmem:[%s4 + $0x10] sm:$0xff]
    %v208 = vld [vmem:[%s4 + $0x18] sm:$0xff]
    %v209 = vld [vmem:[%s4 + $0x20] sm:$0xff]
    %v210 = vld [vmem:[%s4 + $0x28] sm:$0xff]
    %v211 = vld [vmem:[%s4 + $0x30] sm:$0xff]
    %v212 = vld [vmem:[%s4 + $0x38] sm:$0xff]
    %vm213 = vcmask 261120
    %v215 = vsel %vm213, %v197, 0
    %v218 = vsel %vm213, %v202, 0
    %220 = vmatprep.subr.mxu0 %v206
    %221 = vmatpush1.msra.mxu0 %v205
    %222 = vmatprep.subr.mxu0 %v208
    %223 = vmatpush1.msra.mxu0 %v207
    %224 = vmatprep.subr.mxu0 %v210
    %225 = vmatpush1.msra.mxu0 %v209
    %226 = vmatprep.subr.mxu0 %v212
    %227 = vmatpush1.msra.mxu0 %v211
    %228 = vmatprep.subr.mxu0 0.0
    %229 = vmatpush1.msra.mxu0 0.0
    %230 = vmatprep.subr.mxu0 0.0
    %231 = vmatpush1.msra.mxu0 0.0
    %232 = vmatprep.subr.mxu0 0.0
    %233 = vmatpush1.msra.mxu0 0.0
    %234 = vmatprep.subr.mxu0 0.0
    %235 = vmatpush1.msra.mxu0 0.0
    %236 = vmatprep.subr.mxu0 0.0
    %237 = vmatpush1.msra.mxu0 0.0
    %238 = vmatprep.subr.mxu0 0.0
    %239 = vmatpush1.msra.mxu0 0.0
    %240 = vmatprep.subr.mxu0 0.0
    %241 = vmatpush1.msra.mxu0 0.0
    %242 = vmatprep.subr.mxu0 0.0
    %243 = vmatpush1.msra.mxu0 0.0
    %244 = vmatprep.subr.mxu0 0.0
    %245 = vmatpush1.msra.mxu0 0.0
    %246 = vmatprep.subr.mxu0 0.0
    %247 = vmatpush1.msra.mxu0 0.0
    %248 = vmatprep.subr.mxu0 0.0
    %249 = vmatpush1.msra.mxu0 0.0
    %250 = vmatprep.subr.mxu0 0.0
    %251 = vmatpush1.msra.mxu0 0.0
    %252 = vmatprep.subr.mxu0 0.0
    %253 = vmatpush1.msra.mxu0 0.0
    %254 = vmatprep.subr.mxu0 0.0
    %255 = vmatpush1.msra.mxu0 0.0
    %256 = vmatprep.subr.mxu0 0.0
    %257 = vmatpush1.msra.mxu0 0.0
    %258 = vmatprep.subr.mxu0 0.0
    %259 = vmatpush1.msra.mxu0 0.0
    %260 = vmatprep.subr.mxu0 0.0
    %261 = vmatpush1.msra.mxu0 0.0
    %262 = vmatprep.subr.mxu0 0.0
    %263 = vmatpush1.msra.mxu0 0.0
    %264 = vmatprep.subr.mxu0 0.0
    %265 = vmatpush1.msra.mxu0 0.0
    %266 = vmatprep.subr.mxu0 0.0
    %267 = vmatpush1.msra.mxu0 0.0
    %268 = vmatprep.subr.mxu0 0.0
    %269 = vmatpush1.msra.mxu0 0.0
    %270 = vmatprep.subr.mxu0 0.0
    %271 = vmatpush1.msra.mxu0 0.0
    %272 = vmatprep.subr.mxu0 0.0
    %273 = vmatpush1.msra.mxu0 0.0
    %274 = vmatprep.subr.mxu0 0.0
    %275 = vmatpush1.msra.mxu0 0.0
    %276 = vmatprep.subr.mxu0 0.0
    %277 = vmatpush1.msra.mxu0 0.0
    %278 = vmatprep.subr.mxu0 0.0
    %279 = vmatpush1.msra.mxu0 0.0
    %280 = vmatprep.subr.mxu0 0.0
    %281 = vmatpush1.msra.mxu0 0.0
    %282 = vmatprep.subr.mxu0 0.0
    %283 = vmatpush1.msra.mxu0 0.0
    %284 = vmatprep.mubr.f32.mxu0 0.0
    %285 = vmatmul.mubr.f32.gmra.mrb[0].mxu0 %v215
    %v286 = vpop.f32.mrb[0].mxu0
    %v287 = vadd.f32 0.0, %v286
    %v288 = vpop.f32.mrb[0].mxu0
    %v289 = vadd.f32 0.0, %v288
    %290 = vmatprep.mubr.f32.mxu0 0.0
    %291 = vmatmul.mubr.f32.gmra.mrb[0].mxu0 %v218
    %v292 = vpop.f32.mrb[0].mxu0
    %v293 = vadd.f32 0.0, %v292
    %v294 = vpop.f32.mrb[0].mxu0
    %v295 = vadd.f32 0.0, %v294
    %296 = vdwg.mxu0
    %v297 = vld [vmem:[%s5] sm:$0x3]
    %v299 = vlaneseq
    %v300 = vshrl.u32 %v299, 7
    %v301 = vsub.s32 0, %v300
    %v302 = vrot.slane %v297, %v301
    %v303 = vlaneseq
    %v304 = vshrl.u32 %v303, 7
    %v305 = vsub.s32 1, %v304
    %v306 = vrot.slane %v297, %v305
    %309 = vmatprep.subr.mxu0 %v289
    %310 = vmatpush1.msra.mxu0 %v287
    %311 = vmatprep.subr.mxu0 %v295
    %312 = vmatpush1.msra.mxu0 %v293
    %313 = vmatprep.subr.mxu0 0.0
    %314 = vmatpush1.msra.mxu0 0.0
    %315 = vmatprep.subr.mxu0 0.0
    %316 = vmatpush1.msra.mxu0 0.0
    %317 = vmatprep.subr.mxu0 0.0
    %318 = vmatpush1.msra.mxu0 0.0
    %319 = vmatprep.subr.mxu0 0.0
    %320 = vmatpush1.msra.mxu0 0.0
    %321 = vmatprep.subr.mxu0 0.0
    %322 = vmatpush1.msra.mxu0 0.0
    %323 = vmatprep.subr.mxu0 0.0
    %324 = vmatpush1.msra.mxu0 0.0
    %325 = vmatprep.subr.mxu0 0.0
    %326 = vmatpush1.msra.mxu0 0.0
    %327 = vmatprep.subr.mxu0 0.0
    %328 = vmatpush1.msra.mxu0 0.0
    %329 = vmatprep.subr.mxu0 0.0
    %330 = vmatpush1.msra.mxu0 0.0
    %331 = vmatprep.subr.mxu0 0.0
    %332 = vmatpush1.msra.mxu0 0.0
    %333 = vmatprep.subr.mxu0 0.0
    %334 = vmatpush1.msra.mxu0 0.0
    %335 = vmatprep.subr.mxu0 0.0
    %336 = vmatpush1.msra.mxu0 0.0
    %337 = vmatprep.subr.mxu0 0.0
    %338 = vmatpush1.msra.mxu0 0.0
    %339 = vmatprep.subr.mxu0 0.0
    %340 = vmatpush1.msra.mxu0 0.0
    %341 = vmatprep.subr.mxu0 0.0
    %342 = vmatpush1.msra.mxu0 0.0
    %343 = vmatprep.subr.mxu0 0.0
    %344 = vmatpush1.msra.mxu0 0.0
    %345 = vmatprep.subr.mxu0 0.0
    %346 = vmatpush1.msra.mxu0 0.0
    %347 = vmatprep.subr.mxu0 0.0
    %348 = vmatpush1.msra.mxu0 0.0
    %349 = vmatprep.subr.mxu0 0.0
    %350 = vmatpush1.msra.mxu0 0.0
    %351 = vmatprep.subr.mxu0 0.0
    %352 = vmatpush1.msra.mxu0 0.0
    %353 = vmatprep.subr.mxu0 0.0
    %354 = vmatpush1.msra.mxu0 0.0
    %355 = vmatprep.subr.mxu0 0.0
    %356 = vmatpush1.msra.mxu0 0.0
    %357 = vmatprep.subr.mxu0 0.0
    %358 = vmatpush1.msra.mxu0 0.0
    %359 = vmatprep.subr.mxu0 0.0
    %360 = vmatpush1.msra.mxu0 0.0
    %361 = vmatprep.subr.mxu0 0.0
    %362 = vmatpush1.msra.mxu0 0.0
    %363 = vmatprep.subr.mxu0 0.0
    %364 = vmatpush1.msra.mxu0 0.0
    %365 = vmatprep.subr.mxu0 0.0
    %366 = vmatpush1.msra.mxu0 0.0
    %367 = vmatprep.subr.mxu0 0.0
    %368 = vmatpush1.msra.mxu0 0.0
    %369 = vmatprep.subr.mxu0 0.0
    %370 = vmatpush1.msra.mxu0 0.0
    %371 = vmatprep.subr.mxu0 0.0
    %372 = vmatpush1.msra.mxu0 0.0
    %373 = vmatprep.mubr.f32.mxu0 0.0
    %374 = vmatmul.mubr.f32.gmra.mrb[0].mxu0 %v125
    %v375 = vpop.f32.mrb[0].mxu0
    %v376 = vadd.f32 %v302, %v375
    %v377 = vpop.f32.mrb[0].mxu0
    %v378 = vadd.f32 %v306, %v377
    %379 = vmatprep.mubr.f32.mxu0 0.0
    %380 = vmatmul.mubr.f32.gmra.mrb[0].mxu0 %v128
    %v381 = vpop.f32.mrb[0].mxu0
    %v382 = vadd.f32 %v302, %v381
    %v383 = vpop.f32.mrb[0].mxu0
    %v384 = vadd.f32 %v306, %v383
    %385 = vdwg.mxu0
    %v386 = vld [vmem:[%s6] sm:$0xff]
    %v387 = vld [vmem:[%s6 + $0x8] sm:$0xff]
    %v388 = vmul.f32 %v378, 1.442695
    %v389 = vpow.pop %v388
    %v390 = vmul.f32 %v384, 1.442695
    %v391 = vpow.pop %v390
    %v392 = vmul.f32 %v386, %v389
    %v393 = vmul.f32 %v387, %v391
    %v394 = vadd.f32 %v392, %v376
    %v395 = vadd.f32 %v393, %v382
    %396 = vmatprep.subr.mxu0 0.0
    %397 = vmatpush1.xpose.msra.mxu0 %v394
    %398 = vmatprep.subr.mxu0 0.0
    %399 = vmatpush1.xpose.msra.mxu0 %v395
    %400 = vmatprep.subr.mxu0 0.0
    %401 = vmatpush1.xpose.msra.mxu0 0.0
    %402 = vmatprep.subr.mxu0 0.0
    %403 = vmatpush1.xpose.msra.mxu0 0.0
    %404 = vmatprep.subr.mxu0 0.0
    %405 = vmatpush1.xpose.msra.mxu0 0.0
    %406 = vmatprep.subr.mxu0 0.0
    %407 = vmatpush1.xpose.msra.mxu0 0.0
    %408 = vmatprep.subr.mxu0 0.0
    %409 = vmatpush1.xpose.msra.mxu0 0.0
    %410 = vmatprep.subr.mxu0 0.0
    %411 = vmatpush1.xpose.msra.mxu0 0.0
    %412 = vmatprep.subr.mxu0 0.0
    %413 = vmatpush1.xpose.msra.mxu0 0.0
    %414 = vmatprep.subr.mxu0 0.0
    %415 = vmatpush1.xpose.msra.mxu0 0.0
    %416 = vmatprep.subr.mxu0 0.0
    %417 = vmatpush1.xpose.msra.mxu0 0.0
    %418 = vmatprep.subr.mxu0 0.0
    %419 = vmatpush1.xpose.msra.mxu0 0.0
    %420 = vmatprep.subr.mxu0 0.0
    %421 = vmatpush1.xpose.msra.mxu0 0.0
    %422 = vmatprep.subr.mxu0 0.0
    %423 = vmatpush1.xpose.msra.mxu0 0.0
    %424 = vmatprep.subr.mxu0 0.0
    %425 = vmatpush1.xpose.msra.mxu0 0.0
    %426 = vmatprep.subr.mxu0 0.0
    %427 = vmatpush1.xpose.msra.mxu0 0.0
    %428 = vmatprep.subr.mxu0 0.0
    %429 = vmatpush1.xpose.msra.mxu0 0.0
    %430 = vmatprep.subr.mxu0 0.0
    %431 = vmatpush1.xpose.msra.mxu0 0.0
    %432 = vmatprep.subr.mxu0 0.0
    %433 = vmatpush1.xpose.msra.mxu0 0.0
    %434 = vmatprep.subr.mxu0 0.0
    %435 = vmatpush1.xpose.msra.mxu0 0.0
    %436 = vmatprep.subr.mxu0 0.0
    %437 = vmatpush1.xpose.msra.mxu0 0.0
    %438 = vmatprep.subr.mxu0 0.0
    %439 = vmatpush1.xpose.msra.mxu0 0.0
    %440 = vmatprep.subr.mxu0 0.0
    %441 = vmatpush1.xpose.msra.mxu0 0.0
    %442 = vmatprep.subr.mxu0 0.0
    %443 = vmatpush1.xpose.msra.mxu0 0.0
    %444 = vmatprep.subr.mxu0 0.0
    %445 = vmatpush1.xpose.msra.mxu0 0.0
    %446 = vmatprep.subr.mxu0 0.0
    %447 = vmatpush1.xpose.msra.mxu0 0.0
    %448 = vmatprep.subr.mxu0 0.0
    %449 = vmatpush1.xpose.msra.mxu0 0.0
    %450 = vmatprep.subr.mxu0 0.0
    %451 = vmatpush1.xpose.msra.mxu0 0.0
    %452 = vmatprep.subr.mxu0 0.0
    %453 = vmatpush1.xpose.msra.mxu0 0.0
    %454 = vmatprep.subr.mxu0 0.0
    %455 = vmatpush1.xpose.msra.mxu0 0.0
    %456 = vmatprep.subr.mxu0 0.0
    %457 = vmatpush1.xpose.msra.mxu0 0.0
    %458 = vmatprep.subr.mxu0 0.0
    %459 = vmatpush1.xpose.msra.mxu0 0.0
    %460 = vmatprep.mubr.f32.mxu0 0.0
    %461 = vmatmul.mubr.f32.gmra.mrb[0].mxu0 %v394
    %v462 = vpop.f32.mrb[0].mxu0
    %v463 = vadd.f32 0.0, %v462
    %v464 = vpop.f32.mrb[0].mxu0
    %465 = vmatprep.mubr.f32.mxu0 0.0
    %466 = vmatmul.mubr.f32.gmra.mrb[0].mxu0 %v395
    %v467 = vpop.f32.mrb[0].mxu0
    %v468 = vadd.f32 0.0, %v467
    %v469 = vpop.f32.mrb[0].mxu0
    %470 = vdwg.mxu0
    %471 = vst.msk [vmem:[#allocation2] sm:$0xff] %vm123, %v463
    %472 = vst.msk [vmem:[#allocation2 + $0x8] sm:$0xff] %vm123, %v468
    %473 = vst [vmem:[%s8] sm:$0xff] %v376
    %474 = vst [vmem:[%s8 + $0x8] sm:$0xff] %v378
    %475 = vst [vmem:[%s8 + $0x10] sm:$0xff] %v382
    %476 = vst [vmem:[%s8 + $0x18] sm:$0xff] %v384
    // Predicated region
    $region30: #{vgae_forward.1} parent=1 // pred_check
      _
    $region31: #{vgae_forward.1} parent=1 // pred_check_branch
      %478 = sbr.rel (0) target = $region33
    $region32: #{vgae_forward.1} parent=1 // pred_region
      %s480 = ssub.s32 256, 256
      %481 = vsyncadd [#allocation3], %s480
      %s482 = sshll.u32 [#allocation2], 4
      %s483 = int_to_ptr.vmem [resolvable:$true] %s482
      %488 = dma.vmem_to_hbm [thread:$0]  %s483, 256, %s7, [#allocation3], 128, 128, 8
    $region33: #{vgae_forward.1} parent=1 // pred_fallthru
      _
    // Predicated region
    $region34: #{vgae_forward.1} parent=1 // pred_check
      _
    $region35: #{vgae_forward.1} parent=1 // pred_check_branch
      %490 = sbr.rel (0) target = $region37
    $region36: #{vgae_forward.1} parent=1 // pred_region
      _
    $region37: #{vgae_forward.1} parent=1 // pred_fallthru
      _
    // Predicated region
    $region38: #{vgae_forward.1} parent=1 // pred_check
      _
    $region39: #{vgae_forward.1} parent=1 // pred_check_branch
      %492 = sbr.rel (0) target = $region41
    $region40: #{vgae_forward.1} parent=1 // pred_region
      %493 = dma.done [#allocation3], 256
    $region41: #{vgae_forward.1} parent=1 // pred_fallthru
      _
    // Predicated region
    $region42: #{vgae_forward.1} parent=1 // pred_check
      _
    $region43: #{vgae_forward.1} parent=1 // pred_check_branch
      %495 = sbr.rel (0) target = $region45
    $region44: #{vgae_forward.1} parent=1 // pred_region
      _
    $region45: #{vgae_forward.1} parent=1 // pred_fallthru
      _
    %496 = vsyncpa [#allocation3], 1

</llo_original>
